<compile_context>
chip_gen: v5e
topology: v5e:2x2
jax: 0.10.0
libtpu: 0.0.40
codegen_flags: <defaults>
</compile_context>

<pallas_src>
import functools
import math

import numpy as np
import jax
import jax.numpy as jnp
from jax.experimental import pallas as pl
from jax.experimental.pallas import tpu as pltpu

EPS = 1e-5   # torch.nn.LayerNorm default eps
VMEM = pl.BlockSpec(memory_space=pltpu.MemorySpace.VMEM)


def _layernorm(x):
    """One-pass LayerNorm (elementwise_affine=False, biased variance, eps=1e-5).

    sum(x) and sum(x*x) are independent lane reductions -> half the serialized
    XLU latency of the mean-then-centered-variance form.
    """
    n = x.shape[-1]
    s1 = jnp.sum(x, axis=-1, keepdims=True)
    s2 = jnp.sum(x * x, axis=-1, keepdims=True)
    mean = s1 * (1.0 / n)
    var = jnp.maximum(s2 * (1.0 / n) - mean * mean, 0.0)
    return (x - mean) * jax.lax.rsqrt(var + EPS)


def moe_kernel(x_ref, w1c_ref, b1c_ref, w2_ref, b2_ref, we_ref, be_ref,
               r_ref, s_ref, st_ref, o_ref, *, H, batch_K):
    B = x_ref.shape[0]
    E = w2_ref.shape[1]

    # ---- input LayerNorm ---------------------------------------------------
    xn = _layernorm(x_ref[...])                                    # (B, Din) f32
    xn_mx = xn.astype(w1c_ref.dtype)                               # bf16 MXU operand

    # ---- RouterWithGLU: w1 | w_glu fused into one wide matmul ----------------
    hcat = jnp.dot(xn_mx, w1c_ref[...],
                   preferred_element_type=jnp.float32) + b1c_ref[...]   # (B, 2H)
    h1 = hcat[:, :H]
    glu = jax.nn.sigmoid(hcat[:, H:])
    h = _layernorm(jnp.maximum(h1 * glu, 0.0))                     # mul, relu, LN
    logits = jnp.dot(h.astype(w2_ref.dtype), w2_ref[...],
                     preferred_element_type=jnp.float32) + b2_ref[...]  # (B, E)

    # router softmax over the batch dimension (nn.Softmax(dim=0))
    lmax = jnp.max(logits, axis=0, keepdims=True)
    el = jnp.exp(logits - lmax)
    l = el / jnp.sum(el, axis=0, keepdims=True)                    # (B, E), in (0,1]

    # ---- single-pass top-k over dim=0 (per expert column) --------------------
    # rank[b,e] = #{rows that beat row b in column e} (lowest index wins ties);
    # unrolled broadcast-compare + VPU adds, no XLU reductions, no serial argmax.
    rid = jax.lax.broadcasted_iota(jnp.int32, (B, E), 0)
    rank = jnp.zeros((B, E), jnp.float32)
    for bp in range(B):                                            # small static unroll
        lrow = l[bp:bp + 1, :]                                     # (1, E) static slice
        beats = jnp.logical_or(lrow > l,
                               jnp.logical_and(lrow == l, bp < rid))
        rank = rank + beats.astype(jnp.float32)
    mask = (rank < batch_K).astype(jnp.float32)                    # (B, E)

    # renormalized gate = softmax over the selected values of each column.
    # l is already in (0,1], so exp() needs no max-subtraction (identical math).
    es = mask * jnp.exp(l)
    gate = es / jnp.sum(es, axis=0, keepdims=True)                 # (B, E); 0 if unselected

    # ---- ALL experts as one matmul (weights concatenated on out dim) ---------
    y = jnp.dot(xn_mx, we_ref[...],
                preferred_element_type=jnp.float32) + be_ref[...]   # (B, E*Dout)

    # gate expansion / per-expert sum / temp-sum tiling use the constant
    # selector matrices built once in pack_params (MXU matmuls only, f32-exact).
    gate_x = jnp.dot(gate, r_ref[...], preferred_element_type=jnp.float32)   # (B, E*Dout)
    out_flat = y * gate_x        # == concat over experts of the scattered per-expert outputs

    temp_sum = jnp.dot(out_flat, s_ref[...], preferred_element_type=jnp.float32)  # (B, Dout)
    tnorm = _layernorm(temp_sum)                                   # temp_output_layer_norm
    tnorm_rep = jnp.dot(tnorm, st_ref[...], preferred_element_type=jnp.float32)   # (B, E*Dout)

    # concat_sum: add normalized temp sum to every expert chunk, final LN,
    # single store of the whole (B, E*Dout) block.
    o_ref[...] = _layernorm(out_flat + tnorm_rep)


def pack_params(params, matmul_dtype=jnp.bfloat16):
    """One-time packing of MoE weights + constant selector matrices.

    Call once (outside the step path) and reuse: the per-step wrapper then only
    launches the kernel — no per-call concat/transpose/reshape HBM traffic.
    """
    Din, H = params["w1"].shape
    E, _, Dout = params["ew"].shape
    DE = E * Dout

    packed = dict(
        # router: w1 and w_glu (and biases) fused -> one (Din, 2H) matmul
        w1c=jnp.concatenate([params["w1"], params["wg"]], axis=1).astype(matmul_dtype),
        b1c=jnp.concatenate([params["b1"], params["bg"]], axis=1),
        w2=params["w2"].astype(matmul_dtype),
        b2=params["b2"],
        # all E expert Linears collapsed to one (Din, E*Dout) matmul
        w_all=jnp.transpose(params["ew"], (1, 0, 2)).reshape(Din, DE).astype(matmul_dtype),
        b_all=params["eb"].reshape(1, DE),
    )

    # Constant selector matrices (hoisted out of the kernel; f32 so the
    # gating / combine path stays exact).
    col = np.arange(DE)
    R = (col[None, :] // Dout == np.arange(E)[:, None]).astype(np.float32)    # (E, DE)
    S = (col[:, None] % Dout == np.arange(Dout)[None, :]).astype(np.float32)  # (DE, Dout)
    packed["R"] = jnp.asarray(R)       # gate (B,E)   -> (B,DE) expansion
    packed["S"] = jnp.asarray(S)       # per-expert chunk sum (B,DE) -> (B,Dout)
    packed["ST"] = jnp.asarray(S.T)    # temp-sum tiling      (B,Dout) -> (B,DE)
    return packed


def moe_forward(x, packed, K):
    B = x.shape[0]
    E, DE = packed["R"].shape
    H = packed["w2"].shape[0]
    batch_K = math.ceil(K * 1.0 / E * B)

    kernel = functools.partial(moe_kernel, H=H, batch_K=batch_K)
    return pl.pallas_call(
        kernel,
        out_shape=jax.ShapeDtypeStruct((B, DE), jnp.float32),
        in_specs=[VMEM] * 10,
        out_specs=VMEM,
    )(x, packed["w1c"], packed["b1c"], packed["w2"], packed["b2"],
      packed["w_all"], packed["b_all"], packed["R"], packed["S"], packed["ST"])


def init_params(key, Din, Dout, E, H=256):
    ks = jax.random.split(key, 8)
    s = 0.05
    return dict(
        w1=s * jax.random.normal(ks[0], (Din, H), jnp.float32),
        b1=s * jax.random.normal(ks[1], (1, H), jnp.float32),
        wg=s * jax.random.normal(ks[2], (Din, H), jnp.float32),
        bg=s * jax.random.normal(ks[3], (1, H), jnp.float32),
        w2=s * jax.random.normal(ks[4], (H, E), jnp.float32),
        b2=s * jax.random.normal(ks[5], (1, E), jnp.float32),
        ew=s * jax.random.normal(ks[6], (E, Din, Dout), jnp.float32),
        eb=s * jax.random.normal(ks[7], (E, 1, Dout), jnp.float32),
    )


if __name__ == "__main__":
    B, Din, Dout, E, K = 8, 32, 16, 4, 2          # small shapes; router hidden = 256
    key = jax.random.PRNGKey(0)
    kx, kp = jax.random.split(key)
    x = jax.random.normal(kx, (B, Din), jnp.float32)
    params = init_params(kp, Din, Dout, E)
    packed = pack_params(params)                  # one-time packing, off the step path

    fwd = jax.jit(functools.partial(moe_forward, K=K))
    out = jax.block_until_ready(fwd(x, packed))
    assert out.shape == (B, Dout * E) and out.dtype == jnp.float32
    assert bool(jnp.all(jnp.isfinite(out)))
    print("KERNEL_OK")
</pallas_src>

<mosaic_0001>
module attributes {stable_mosaic.version = 11 : i64} {
  func.func @moe_kernel(%arg0: memref<8x32xf32, #tpu.memory_space<vmem>>, %arg1: memref<32x512xbf16, #tpu.memory_space<vmem>>, %arg2: memref<1x512xf32, #tpu.memory_space<vmem>>, %arg3: memref<256x4xbf16, #tpu.memory_space<vmem>>, %arg4: memref<1x4xf32, #tpu.memory_space<vmem>>, %arg5: memref<32x64xbf16, #tpu.memory_space<vmem>>, %arg6: memref<1x64xf32, #tpu.memory_space<vmem>>, %arg7: memref<4x64xf32, #tpu.memory_space<vmem>>, %arg8: memref<64x16xf32, #tpu.memory_space<vmem>>, %arg9: memref<16x64xf32, #tpu.memory_space<vmem>>, %arg10: memref<8x64xf32, #tpu.memory_space<vmem>>) attributes {dimension_semantics = [], scalar_prefetch = 0 : i64, scratch_operands = 0 : i64, tpu.core_type = #tpu.core_type<tc>} {
    %c0 = arith.constant 0 : index
    %c0_0 = arith.constant 0 : index
    %0 = vector.load %arg0[%c0, %c0_0] : memref<8x32xf32, #tpu.memory_space<vmem>>, vector<8x32xf32>
    %cst = arith.constant dense<0.000000e+00> : vector<8xf32>
    %1 = vector.multi_reduction <add>, %0, %cst [1] : vector<8x32xf32> to vector<8xf32>
    %2 = vector.shape_cast %1 : vector<8xf32> to vector<8x1xf32>
    %3 = arith.mulf %0, %0 : vector<8x32xf32>
    %cst_1 = arith.constant dense<0.000000e+00> : vector<8xf32>
    %4 = vector.multi_reduction <add>, %3, %cst_1 [1] : vector<8x32xf32> to vector<8xf32>
    %5 = vector.shape_cast %4 : vector<8xf32> to vector<8x1xf32>
    %cst_2 = arith.constant 3.125000e-02 : f32
    %6 = vector.broadcast %cst_2 : f32 to vector<8x1xf32>
    %7 = arith.mulf %2, %6 : vector<8x1xf32>
    %cst_3 = arith.constant 3.125000e-02 : f32
    %8 = vector.broadcast %cst_3 : f32 to vector<8x1xf32>
    %9 = arith.mulf %5, %8 : vector<8x1xf32>
    %10 = arith.mulf %7, %7 : vector<8x1xf32>
    %11 = arith.subf %9, %10 : vector<8x1xf32>
    %cst_4 = arith.constant 0.000000e+00 : f32
    %12 = vector.broadcast %cst_4 : f32 to vector<8x1xf32>
    %13 = arith.maximumf %11, %12 : vector<8x1xf32>
    %14 = vector.broadcast %7 : vector<8x1xf32> to vector<8x32xf32>
    %15 = arith.subf %0, %14 : vector<8x32xf32>
    %cst_5 = arith.constant 9.99999974E-6 : f32
    %16 = vector.broadcast %cst_5 : f32 to vector<8x1xf32>
    %17 = arith.addf %13, %16 : vector<8x1xf32>
    %18 = math.rsqrt %17 : vector<8x1xf32>
    %19 = vector.broadcast %18 : vector<8x1xf32> to vector<8x32xf32>
    %20 = arith.mulf %15, %19 : vector<8x32xf32>
    %21 = arith.truncf %20 : vector<8x32xf32> to vector<8x32xbf16>
    %c0_6 = arith.constant 0 : index
    %c0_7 = arith.constant 0 : index
    %22 = vector.load %arg1[%c0_6, %c0_7] : memref<32x512xbf16, #tpu.memory_space<vmem>>, vector<32x512xbf16>
    %cst_8 = arith.constant dense<0.000000e+00> : vector<8x512xf32>
    %23 = tpu.matmul %21, %22, %cst_8 {dimension_numbers = #tpu.dot_dimension_numbers<[1], [0], [0], [1], [0, 0, 1, 1], [], []>} : vector<8x32xbf16>, vector<32x512xbf16>, vector<8x512xf32> -> vector<8x512xf32>
    %c0_9 = arith.constant 0 : index
    %c0_10 = arith.constant 0 : index
    %24 = vector.load %arg2[%c0_9, %c0_10] : memref<1x512xf32, #tpu.memory_space<vmem>>, vector<1x512xf32>
    %25 = vector.broadcast %24 : vector<1x512xf32> to vector<8x512xf32>
    %26 = arith.addf %23, %25 : vector<8x512xf32>
    %27 = vector.extract_strided_slice %26 {offsets = [0, 0], sizes = [8, 256], strides = [1, 1]} : vector<8x512xf32> to vector<8x256xf32>
    %28 = vector.extract_strided_slice %26 {offsets = [0, 256], sizes = [8, 256], strides = [1, 1]} : vector<8x512xf32> to vector<8x256xf32>
    %29 = arith.negf %28 : vector<8x256xf32>
    %30 = math.exp %29 : vector<8x256xf32>
    %cst_11 = arith.constant 1.000000e+00 : f32
    %31 = vector.broadcast %cst_11 : f32 to vector<8x256xf32>
    %32 = arith.addf %31, %30 : vector<8x256xf32>
    %33 = arith.divf %31, %32 : vector<8x256xf32>
    %34 = arith.mulf %27, %33 : vector<8x256xf32>
    %cst_12 = arith.constant 0.000000e+00 : f32
    %35 = vector.broadcast %cst_12 : f32 to vector<8x256xf32>
    %36 = arith.maximumf %34, %35 : vector<8x256xf32>
    %cst_13 = arith.constant dense<0.000000e+00> : vector<8xf32>
    %37 = vector.multi_reduction <add>, %36, %cst_13 [1] : vector<8x256xf32> to vector<8xf32>
    %38 = vector.shape_cast %37 : vector<8xf32> to vector<8x1xf32>
    %39 = arith.mulf %36, %36 : vector<8x256xf32>
    %cst_14 = arith.constant dense<0.000000e+00> : vector<8xf32>
    %40 = vector.multi_reduction <add>, %39, %cst_14 [1] : vector<8x256xf32> to vector<8xf32>
    %41 = vector.shape_cast %40 : vector<8xf32> to vector<8x1xf32>
    %cst_15 = arith.constant 3.906250e-03 : f32
    %42 = vector.broadcast %cst_15 : f32 to vector<8x1xf32>
    %43 = arith.mulf %38, %42 : vector<8x1xf32>
    %cst_16 = arith.constant 3.906250e-03 : f32
    %44 = vector.broadcast %cst_16 : f32 to vector<8x1xf32>
    %45 = arith.mulf %41, %44 : vector<8x1xf32>
    %46 = arith.mulf %43, %43 : vector<8x1xf32>
    %47 = arith.subf %45, %46 : vector<8x1xf32>
    %cst_17 = arith.constant 0.000000e+00 : f32
    %48 = vector.broadcast %cst_17 : f32 to vector<8x1xf32>
    %49 = arith.maximumf %47, %48 : vector<8x1xf32>
    %50 = vector.broadcast %43 : vector<8x1xf32> to vector<8x256xf32>
    %51 = arith.subf %36, %50 : vector<8x256xf32>
    %cst_18 = arith.constant 9.99999974E-6 : f32
    %52 = vector.broadcast %cst_18 : f32 to vector<8x1xf32>
    %53 = arith.addf %49, %52 : vector<8x1xf32>
    %54 = math.rsqrt %53 : vector<8x1xf32>
    %55 = vector.broadcast %54 : vector<8x1xf32> to vector<8x256xf32>
    %56 = arith.mulf %51, %55 : vector<8x256xf32>
    %57 = arith.truncf %56 : vector<8x256xf32> to vector<8x256xbf16>
    %c0_19 = arith.constant 0 : index
    %c0_20 = arith.constant 0 : index
    %58 = vector.load %arg3[%c0_19, %c0_20] : memref<256x4xbf16, #tpu.memory_space<vmem>>, vector<256x4xbf16>
    %cst_21 = arith.constant dense<0.000000e+00> : vector<8x4xf32>
    %59 = tpu.matmul %57, %58, %cst_21 {dimension_numbers = #tpu.dot_dimension_numbers<[1], [0], [0], [1], [0, 0, 1, 1], [], []>} : vector<8x256xbf16>, vector<256x4xbf16>, vector<8x4xf32> -> vector<8x4xf32>
    %c0_22 = arith.constant 0 : index
    %c0_23 = arith.constant 0 : index
    %60 = vector.load %arg4[%c0_22, %c0_23] : memref<1x4xf32, #tpu.memory_space<vmem>>, vector<1x4xf32>
    %61 = vector.broadcast %60 : vector<1x4xf32> to vector<8x4xf32>
    %62 = arith.addf %59, %61 : vector<8x4xf32>
    %cst_24 = arith.constant dense<0xFF800000> : vector<4xf32>
    %63 = vector.multi_reduction <maximumf>, %62, %cst_24 [0] : vector<8x4xf32> to vector<4xf32>
    %64 = vector.shape_cast %63 : vector<4xf32> to vector<1x4xf32>
    %65 = vector.broadcast %64 : vector<1x4xf32> to vector<8x4xf32>
    %66 = arith.subf %62, %65 : vector<8x4xf32>
    %67 = math.exp %66 : vector<8x4xf32>
    %cst_25 = arith.constant dense<0.000000e+00> : vector<4xf32>
    %68 = vector.multi_reduction <add>, %67, %cst_25 [0] : vector<8x4xf32> to vector<4xf32>
    %69 = vector.shape_cast %68 : vector<4xf32> to vector<1x4xf32>
    %70 = vector.broadcast %69 : vector<1x4xf32> to vector<8x4xf32>
    %71 = arith.divf %67, %70 : vector<8x4xf32>
    %72 = tpu.iota {dimensions = array<i32: 0>} : vector<8x4xi32>
    %cst_26 = arith.constant 0.000000e+00 : f32
    %73 = vector.broadcast %cst_26 : f32 to vector<8x4xf32>
    %74 = vector.extract_strided_slice %71 {offsets = [0, 0], sizes = [1, 4], strides = [1, 1]} : vector<8x4xf32> to vector<1x4xf32>
    %75 = vector.broadcast %74 : vector<1x4xf32> to vector<8x4xf32>
    %76 = arith.cmpf ogt, %75, %71 : vector<8x4xf32>
    %77 = vector.broadcast %74 : vector<1x4xf32> to vector<8x4xf32>
    %78 = arith.cmpf oeq, %77, %71 : vector<8x4xf32>
    %c0_i32 = arith.constant 0 : i32
    %79 = vector.broadcast %c0_i32 : i32 to vector<8x4xi32>
    %80 = arith.cmpi sgt, %72, %79 : vector<8x4xi32>
    %81 = arith.andi %78, %80 : vector<8x4xi1>
    %82 = arith.ori %76, %81 : vector<8x4xi1>
    %83 = arith.extui %82 : vector<8x4xi1> to vector<8x4xi32>
    %84 = arith.sitofp %83 : vector<8x4xi32> to vector<8x4xf32>
    %85 = arith.addf %73, %84 : vector<8x4xf32>
    %86 = vector.extract_strided_slice %71 {offsets = [1, 0], sizes = [1, 4], strides = [1, 1]} : vector<8x4xf32> to vector<1x4xf32>
    %87 = vector.broadcast %86 : vector<1x4xf32> to vector<8x4xf32>
    %88 = arith.cmpf ogt, %87, %71 : vector<8x4xf32>
    %89 = vector.broadcast %86 : vector<1x4xf32> to vector<8x4xf32>
    %90 = arith.cmpf oeq, %89, %71 : vector<8x4xf32>
    %c1_i32 = arith.constant 1 : i32
    %91 = vector.broadcast %c1_i32 : i32 to vector<8x4xi32>
    %92 = arith.cmpi sgt, %72, %91 : vector<8x4xi32>
    %93 = arith.andi %90, %92 : vector<8x4xi1>
    %94 = arith.ori %88, %93 : vector<8x4xi1>
    %95 = arith.extui %94 : vector<8x4xi1> to vector<8x4xi32>
    %96 = arith.sitofp %95 : vector<8x4xi32> to vector<8x4xf32>
    %97 = arith.addf %85, %96 : vector<8x4xf32>
    %98 = vector.extract_strided_slice %71 {offsets = [2, 0], sizes = [1, 4], strides = [1, 1]} : vector<8x4xf32> to vector<1x4xf32>
    %99 = vector.broadcast %98 : vector<1x4xf32> to vector<8x4xf32>
    %100 = arith.cmpf ogt, %99, %71 : vector<8x4xf32>
    %101 = vector.broadcast %98 : vector<1x4xf32> to vector<8x4xf32>
    %102 = arith.cmpf oeq, %101, %71 : vector<8x4xf32>
    %c2_i32 = arith.constant 2 : i32
    %103 = vector.broadcast %c2_i32 : i32 to vector<8x4xi32>
    %104 = arith.cmpi sgt, %72, %103 : vector<8x4xi32>
    %105 = arith.andi %102, %104 : vector<8x4xi1>
    %106 = arith.ori %100, %105 : vector<8x4xi1>
    %107 = arith.extui %106 : vector<8x4xi1> to vector<8x4xi32>
    %108 = arith.sitofp %107 : vector<8x4xi32> to vector<8x4xf32>
    %109 = arith.addf %97, %108 : vector<8x4xf32>
    %110 = vector.extract_strided_slice %71 {offsets = [3, 0], sizes = [1, 4], strides = [1, 1]} : vector<8x4xf32> to vector<1x4xf32>
    %111 = vector.broadcast %110 : vector<1x4xf32> to vector<8x4xf32>
    %112 = arith.cmpf ogt, %111, %71 : vector<8x4xf32>
    %113 = vector.broadcast %110 : vector<1x4xf32> to vector<8x4xf32>
    %114 = arith.cmpf oeq, %113, %71 : vector<8x4xf32>
    %c3_i32 = arith.constant 3 : i32
    %115 = vector.broadcast %c3_i32 : i32 to vector<8x4xi32>
    %116 = arith.cmpi sgt, %72, %115 : vector<8x4xi32>
    %117 = arith.andi %114, %116 : vector<8x4xi1>
    %118 = arith.ori %112, %117 : vector<8x4xi1>
    %119 = arith.extui %118 : vector<8x4xi1> to vector<8x4xi32>
    %120 = arith.sitofp %119 : vector<8x4xi32> to vector<8x4xf32>
    %121 = arith.addf %109, %120 : vector<8x4xf32>
    %122 = vector.extract_strided_slice %71 {offsets = [4, 0], sizes = [1, 4], strides = [1, 1]} : vector<8x4xf32> to vector<1x4xf32>
    %123 = vector.broadcast %122 : vector<1x4xf32> to vector<8x4xf32>
    %124 = arith.cmpf ogt, %123, %71 : vector<8x4xf32>
    %125 = vector.broadcast %122 : vector<1x4xf32> to vector<8x4xf32>
    %126 = arith.cmpf oeq, %125, %71 : vector<8x4xf32>
    %c4_i32 = arith.constant 4 : i32
    %127 = vector.broadcast %c4_i32 : i32 to vector<8x4xi32>
    %128 = arith.cmpi sgt, %72, %127 : vector<8x4xi32>
    %129 = arith.andi %126, %128 : vector<8x4xi1>
    %130 = arith.ori %124, %129 : vector<8x4xi1>
    %131 = arith.extui %130 : vector<8x4xi1> to vector<8x4xi32>
    %132 = arith.sitofp %131 : vector<8x4xi32> to vector<8x4xf32>
    %133 = arith.addf %121, %132 : vector<8x4xf32>
    %134 = vector.extract_strided_slice %71 {offsets = [5, 0], sizes = [1, 4], strides = [1, 1]} : vector<8x4xf32> to vector<1x4xf32>
    %135 = vector.broadcast %134 : vector<1x4xf32> to vector<8x4xf32>
    %136 = arith.cmpf ogt, %135, %71 : vector<8x4xf32>
    %137 = vector.broadcast %134 : vector<1x4xf32> to vector<8x4xf32>
    %138 = arith.cmpf oeq, %137, %71 : vector<8x4xf32>
    %c5_i32 = arith.constant 5 : i32
    %139 = vector.broadcast %c5_i32 : i32 to vector<8x4xi32>
    %140 = arith.cmpi sgt, %72, %139 : vector<8x4xi32>
    %141 = arith.andi %138, %140 : vector<8x4xi1>
    %142 = arith.ori %136, %141 : vector<8x4xi1>
    %143 = arith.extui %142 : vector<8x4xi1> to vector<8x4xi32>
    %144 = arith.sitofp %143 : vector<8x4xi32> to vector<8x4xf32>
    %145 = arith.addf %133, %144 : vector<8x4xf32>
    %146 = vector.extract_strided_slice %71 {offsets = [6, 0], sizes = [1, 4], strides = [1, 1]} : vector<8x4xf32> to vector<1x4xf32>
    %147 = vector.broadcast %146 : vector<1x4xf32> to vector<8x4xf32>
    %148 = arith.cmpf ogt, %147, %71 : vector<8x4xf32>
    %149 = vector.broadcast %146 : vector<1x4xf32> to vector<8x4xf32>
    %150 = arith.cmpf oeq, %149, %71 : vector<8x4xf32>
    %c6_i32 = arith.constant 6 : i32
    %151 = vector.broadcast %c6_i32 : i32 to vector<8x4xi32>
    %152 = arith.cmpi sgt, %72, %151 : vector<8x4xi32>
    %153 = arith.andi %150, %152 : vector<8x4xi1>
    %154 = arith.ori %148, %153 : vector<8x4xi1>
    %155 = arith.extui %154 : vector<8x4xi1> to vector<8x4xi32>
    %156 = arith.sitofp %155 : vector<8x4xi32> to vector<8x4xf32>
    %157 = arith.addf %145, %156 : vector<8x4xf32>
    %158 = vector.extract_strided_slice %71 {offsets = [7, 0], sizes = [1, 4], strides = [1, 1]} : vector<8x4xf32> to vector<1x4xf32>
    %159 = vector.broadcast %158 : vector<1x4xf32> to vector<8x4xf32>
    %160 = arith.cmpf ogt, %159, %71 : vector<8x4xf32>
    %161 = vector.broadcast %158 : vector<1x4xf32> to vector<8x4xf32>
    %162 = arith.cmpf oeq, %161, %71 : vector<8x4xf32>
    %c7_i32 = arith.constant 7 : i32
    %163 = vector.broadcast %c7_i32 : i32 to vector<8x4xi32>
    %164 = arith.cmpi sgt, %72, %163 : vector<8x4xi32>
    %165 = arith.andi %162, %164 : vector<8x4xi1>
    %166 = arith.ori %160, %165 : vector<8x4xi1>
    %167 = arith.extui %166 : vector<8x4xi1> to vector<8x4xi32>
    %168 = arith.sitofp %167 : vector<8x4xi32> to vector<8x4xf32>
    %169 = arith.addf %157, %168 : vector<8x4xf32>
    %cst_27 = arith.constant 4.000000e+00 : f32
    %170 = vector.broadcast %cst_27 : f32 to vector<8x4xf32>
    %171 = arith.cmpf olt, %169, %170 : vector<8x4xf32>
    %172 = arith.extui %171 : vector<8x4xi1> to vector<8x4xi32>
    %173 = arith.sitofp %172 : vector<8x4xi32> to vector<8x4xf32>
    %174 = math.exp %71 : vector<8x4xf32>
    %175 = arith.mulf %173, %174 : vector<8x4xf32>
    %cst_28 = arith.constant dense<0.000000e+00> : vector<4xf32>
    %176 = vector.multi_reduction <add>, %175, %cst_28 [0] : vector<8x4xf32> to vector<4xf32>
    %177 = vector.shape_cast %176 : vector<4xf32> to vector<1x4xf32>
    %178 = vector.broadcast %177 : vector<1x4xf32> to vector<8x4xf32>
    %179 = arith.divf %175, %178 : vector<8x4xf32>
    %c0_29 = arith.constant 0 : index
    %c0_30 = arith.constant 0 : index
    %180 = vector.load %arg5[%c0_29, %c0_30] : memref<32x64xbf16, #tpu.memory_space<vmem>>, vector<32x64xbf16>
    %cst_31 = arith.constant dense<0.000000e+00> : vector<8x64xf32>
    %181 = tpu.matmul %21, %180, %cst_31 {dimension_numbers = #tpu.dot_dimension_numbers<[1], [0], [0], [1], [0, 0, 1, 1], [], []>} : vector<8x32xbf16>, vector<32x64xbf16>, vector<8x64xf32> -> vector<8x64xf32>
    %c0_32 = arith.constant 0 : index
    %c0_33 = arith.constant 0 : index
    %182 = vector.load %arg6[%c0_32, %c0_33] : memref<1x64xf32, #tpu.memory_space<vmem>>, vector<1x64xf32>
    %183 = vector.broadcast %182 : vector<1x64xf32> to vector<8x64xf32>
    %184 = arith.addf %181, %183 : vector<8x64xf32>
    %c0_34 = arith.constant 0 : index
    %c0_35 = arith.constant 0 : index
    %185 = vector.load %arg7[%c0_34, %c0_35] : memref<4x64xf32, #tpu.memory_space<vmem>>, vector<4x64xf32>
    %cst_36 = arith.constant dense<0.000000e+00> : vector<8x64xf32>
    %186 = tpu.matmul %179, %185, %cst_36 {dimension_numbers = #tpu.dot_dimension_numbers<[1], [0], [0], [1], [0, 0, 1, 1], [], []>} : vector<8x4xf32>, vector<4x64xf32>, vector<8x64xf32> -> vector<8x64xf32>
    %187 = arith.mulf %184, %186 : vector<8x64xf32>
    %c0_37 = arith.constant 0 : index
    %c0_38 = arith.constant 0 : index
    %188 = vector.load %arg8[%c0_37, %c0_38] : memref<64x16xf32, #tpu.memory_space<vmem>>, vector<64x16xf32>
    %cst_39 = arith.constant dense<0.000000e+00> : vector<8x16xf32>
    %189 = tpu.matmul %187, %188, %cst_39 {dimension_numbers = #tpu.dot_dimension_numbers<[1], [0], [0], [1], [0, 0, 1, 1], [], []>} : vector<8x64xf32>, vector<64x16xf32>, vector<8x16xf32> -> vector<8x16xf32>
    %cst_40 = arith.constant dense<0.000000e+00> : vector<8xf32>
    %190 = vector.multi_reduction <add>, %189, %cst_40 [1] : vector<8x16xf32> to vector<8xf32>
    %191 = vector.shape_cast %190 : vector<8xf32> to vector<8x1xf32>
    %192 = arith.mulf %189, %189 : vector<8x16xf32>
    %cst_41 = arith.constant dense<0.000000e+00> : vector<8xf32>
    %193 = vector.multi_reduction <add>, %192, %cst_41 [1] : vector<8x16xf32> to vector<8xf32>
    %194 = vector.shape_cast %193 : vector<8xf32> to vector<8x1xf32>
    %cst_42 = arith.constant 6.250000e-02 : f32
    %195 = vector.broadcast %cst_42 : f32 to vector<8x1xf32>
    %196 = arith.mulf %191, %195 : vector<8x1xf32>
    %cst_43 = arith.constant 6.250000e-02 : f32
    %197 = vector.broadcast %cst_43 : f32 to vector<8x1xf32>
    %198 = arith.mulf %194, %197 : vector<8x1xf32>
    %199 = arith.mulf %196, %196 : vector<8x1xf32>
    %200 = arith.subf %198, %199 : vector<8x1xf32>
    %cst_44 = arith.constant 0.000000e+00 : f32
    %201 = vector.broadcast %cst_44 : f32 to vector<8x1xf32>
    %202 = arith.maximumf %200, %201 : vector<8x1xf32>
    %203 = vector.broadcast %196 : vector<8x1xf32> to vector<8x16xf32>
    %204 = arith.subf %189, %203 : vector<8x16xf32>
    %cst_45 = arith.constant 9.99999974E-6 : f32
    %205 = vector.broadcast %cst_45 : f32 to vector<8x1xf32>
    %206 = arith.addf %202, %205 : vector<8x1xf32>
    %207 = math.rsqrt %206 : vector<8x1xf32>
    %208 = vector.broadcast %207 : vector<8x1xf32> to vector<8x16xf32>
    %209 = arith.mulf %204, %208 : vector<8x16xf32>
    %c0_46 = arith.constant 0 : index
    %c0_47 = arith.constant 0 : index
    %210 = vector.load %arg9[%c0_46, %c0_47] : memref<16x64xf32, #tpu.memory_space<vmem>>, vector<16x64xf32>
    %cst_48 = arith.constant dense<0.000000e+00> : vector<8x64xf32>
    %211 = tpu.matmul %209, %210, %cst_48 {dimension_numbers = #tpu.dot_dimension_numbers<[1], [0], [0], [1], [0, 0, 1, 1], [], []>} : vector<8x16xf32>, vector<16x64xf32>, vector<8x64xf32> -> vector<8x64xf32>
    %212 = arith.addf %187, %211 : vector<8x64xf32>
    %cst_49 = arith.constant dense<0.000000e+00> : vector<8xf32>
    %213 = vector.multi_reduction <add>, %212, %cst_49 [1] : vector<8x64xf32> to vector<8xf32>
    %214 = vector.shape_cast %213 : vector<8xf32> to vector<8x1xf32>
    %215 = arith.mulf %212, %212 : vector<8x64xf32>
    %cst_50 = arith.constant dense<0.000000e+00> : vector<8xf32>
    %216 = vector.multi_reduction <add>, %215, %cst_50 [1] : vector<8x64xf32> to vector<8xf32>
    %217 = vector.shape_cast %216 : vector<8xf32> to vector<8x1xf32>
    %cst_51 = arith.constant 1.562500e-02 : f32
    %218 = vector.broadcast %cst_51 : f32 to vector<8x1xf32>
    %219 = arith.mulf %214, %218 : vector<8x1xf32>
    %cst_52 = arith.constant 1.562500e-02 : f32
    %220 = vector.broadcast %cst_52 : f32 to vector<8x1xf32>
    %221 = arith.mulf %217, %220 : vector<8x1xf32>
    %222 = arith.mulf %219, %219 : vector<8x1xf32>
    %223 = arith.subf %221, %222 : vector<8x1xf32>
    %cst_53 = arith.constant 0.000000e+00 : f32
    %224 = vector.broadcast %cst_53 : f32 to vector<8x1xf32>
    %225 = arith.maximumf %223, %224 : vector<8x1xf32>
    %226 = vector.broadcast %219 : vector<8x1xf32> to vector<8x64xf32>
    %227 = arith.subf %212, %226 : vector<8x64xf32>
    %cst_54 = arith.constant 9.99999974E-6 : f32
    %228 = vector.broadcast %cst_54 : f32 to vector<8x1xf32>
    %229 = arith.addf %225, %228 : vector<8x1xf32>
    %230 = math.rsqrt %229 : vector<8x1xf32>
    %231 = vector.broadcast %230 : vector<8x1xf32> to vector<8x64xf32>
    %232 = arith.mulf %227, %231 : vector<8x64xf32>
    %c0_55 = arith.constant 0 : index
    %c0_56 = arith.constant 0 : index
    %233 = vector.load %arg10[%c0_55, %c0_56] : memref<8x64xf32, #tpu.memory_space<vmem>>, vector<8x64xf32>
    tpu.vector_store %arg10[%c0_55, %c0_56], %232 {strides = array<i32>} : memref<8x64xf32, #tpu.memory_space<vmem>>, vector<8x64xf32>,
    return
  }
}

</mosaic_0001>

<llo_original>
// kernel: moe_forward.1
$region0: #{moe_forward.1}
  #allocation0 [shape = 'u32[]', space=smem, size = 0x4, offset = 0x4, fixed_abs, tag = 'smem constant byte address 0x4 - core index']
  #allocation1 [shape = 'u32[72,128]{1,0:T(1,128)}', space=vmem, size = 0x9000, scoped, tag = 'internal scratch']
  %s0 = inlined_call_operand.vmem [shape: f32[8,32], index: 0, kind: input, shape index: {}]
  %s1 = inlined_call_operand.vmem [shape: bf16[32,512], index: 1, kind: input, shape index: {}]
  %s2 = inlined_call_operand.vmem [shape: f32[1,512], index: 2, kind: input, shape index: {}]
  %s3 = inlined_call_operand.vmem [shape: bf16[256,4], index: 3, kind: input, shape index: {}]
  %s4 = inlined_call_operand.vmem [shape: f32[1,4], index: 4, kind: input, shape index: {}]
  %s5 = inlined_call_operand.vmem [shape: bf16[32,64], index: 5, kind: input, shape index: {}]
  %s6 = inlined_call_operand.vmem [shape: f32[1,64], index: 6, kind: input, shape index: {}]
  %s7 = inlined_call_operand.vmem [shape: f32[4,64], index: 7, kind: input, shape index: {}]
  %s8 = inlined_call_operand.vmem [shape: f32[64,16], index: 8, kind: input, shape index: {}]
  %s9 = inlined_call_operand.vmem [shape: f32[16,64], index: 9, kind: input, shape index: {}]
  %s10 = inlined_call_operand.hbm [shape: f32[8,64], index: 10, kind: output, shape index: {}]
  %s11 = sld [smem:[#allocation0]]
  $region50: #{moe_forward.1} parent=0
    _
  %s13 = ssub.s32 1, %s11
  %s14 = scalar_select 0, %s13, %s11
  $region1: #{moe_forward.1} parent=0
    #allocation2 [shape = 'u8[4096]{0}', space=vmem, size = 0x1000, scoped, tag = 'output window, operand 0, single buffered']
    #allocation3 [shape = 's32[1]{0}', space=sflag, size = 0x4, scoped, tag = 'scoped memory for moe_forward.1']
    %15 = vsyncpa [#allocation3], 0
    // Predicated region
    $region2: #{moe_forward.1} parent=1 // pred_check
      _
    $region3: #{moe_forward.1} parent=1 // pred_check_branch
      %17 = sbr.rel (0) target = $region5
    $region4: #{moe_forward.1} parent=1 // pred_region
      _
    $region5: #{moe_forward.1} parent=1 // pred_fallthru
      _
    // Predicated region
    $region6: #{moe_forward.1} parent=1 // pred_check
      _
    $region7: #{moe_forward.1} parent=1 // pred_check_branch
      %19 = sbr.rel (0) target = $region9
    $region8: #{moe_forward.1} parent=1 // pred_region
      _
    $region9: #{moe_forward.1} parent=1 // pred_fallthru
      _
    // Predicated region
    $region10: #{moe_forward.1} parent=1 // pred_check
      _
    $region11: #{moe_forward.1} parent=1 // pred_check_branch
      %21 = sbr.rel (0) target = $region13
    $region12: #{moe_forward.1} parent=1 // pred_region
      _
    $region13: #{moe_forward.1} parent=1 // pred_fallthru
      _
    // Predicated region
    $region14: #{moe_forward.1} parent=1 // pred_check
      _
    $region15: #{moe_forward.1} parent=1 // pred_check_branch
      %23 = sbr.rel (0) target = $region17
    $region16: #{moe_forward.1} parent=1 // pred_region
      _
    $region17: #{moe_forward.1} parent=1 // pred_fallthru
      _
    // Predicated region
    $region18: #{moe_forward.1} parent=1 // pred_check
      _
    $region19: #{moe_forward.1} parent=1 // pred_check_branch
      %25 = sbr.rel (0) target = $region21
    $region20: #{moe_forward.1} parent=1 // pred_region
      _
    $region21: #{moe_forward.1} parent=1 // pred_fallthru
      _
    // Predicated region
    $region22: #{moe_forward.1} parent=1 // pred_check
      _
    $region23: #{moe_forward.1} parent=1 // pred_check_branch
      %27 = sbr.rel (0) target = $region25
    $region24: #{moe_forward.1} parent=1 // pred_region
      _
    $region25: #{moe_forward.1} parent=1 // pred_fallthru
      _
    // Predicated region
    $region26: #{moe_forward.1} parent=1 // pred_check
      _
    $region27: #{moe_forward.1} parent=1 // pred_check_branch
      %29 = sbr.rel (0) target = $region29
    $region28: #{moe_forward.1} parent=1 // pred_region
      _
    $region29: #{moe_forward.1} parent=1 // pred_fallthru
      _
    // Predicated region
    $region30: #{moe_forward.1} parent=1 // pred_check
      _
    $region31: #{moe_forward.1} parent=1 // pred_check_branch
      %31 = sbr.rel (0) target = $region33
    $region32: #{moe_forward.1} parent=1 // pred_region
      _
    $region33: #{moe_forward.1} parent=1 // pred_fallthru
      _
    // Predicated region
    $region34: #{moe_forward.1} parent=1 // pred_check
      _
    $region35: #{moe_forward.1} parent=1 // pred_check_branch
      %33 = sbr.rel (0) target = $region37
    $region36: #{moe_forward.1} parent=1 // pred_region
      _
    $region37: #{moe_forward.1} parent=1 // pred_fallthru
      _
    // Predicated region
    $region38: #{moe_forward.1} parent=1 // pred_check
      _
    $region39: #{moe_forward.1} parent=1 // pred_check_branch
      %35 = sbr.rel (0) target = $region41
    $region40: #{moe_forward.1} parent=1 // pred_region
      _
    $region41: #{moe_forward.1} parent=1 // pred_fallthru
      _
    %v37 = vld [vmem:[%s0] sm:$0xff]
    %vm38 = vcmask 261120
    %v39 = vsel %vm38, %v37, 0.0
    %40 = vadd.xlane.f32.xlu0 %v39
    %v41 = vpop.xlane.xlu0 %40
    %v42 = vmul.f32 %v37, %v37
    %v43 = vsel %vm38, %v42, 0.0
    %44 = vadd.xlane.f32.xlu0 %v43
    %v45 = vpop.xlane.xlu0 %44
    %v46 = vmul.f32 %v41, 0.03125
    %v47 = vmul.f32 %v45, 0.03125
    %v48 = vmul.f32 %v46, %v46
    %v49 = vsub.f32 %v47, %v48
    %v50 = vmax.f32 %v49, 0.0
    %v51 = vsub.f32 %v37, %v46
    %v52 = vadd.f32 %v50, 1e-05
    %v53 = vrsqrt.pop %v52
    %v54 = vmul.f32 %v53, %v52
    %v55 = vmul.f32 %v54, %v53
    %v56 = vmul.f32 0.5, %v55
    %v57 = vsub.f32 1.5, %v56
    %v58 = vmul.f32 %v53, %v57
    %vm59 = vweird.f32 %v52
    %vm60 = vweird.f32 %v53
    %vm61 = vmor %vm59, %vm60
    %v62 = vsel %vm61, %v53, %v58
    %v63 = vmul.f32 %v51, %v62
    %v64 = vpack.c.bf16 %v63, %v63
    %v65 = vld [vmem:[%s1] sm:$0xff]
    %v66 = vld [vmem:[%s1 + $0x8] sm:$0xff]
    %v67 = vld [vmem:[%s1 + $0x10] sm:$0xff]
    %v68 = vld [vmem:[%s1 + $0x18] sm:$0xff]
    %v69 = vld [vmem:[%s1 + $0x20] sm:$0xff]
    %v70 = vld [vmem:[%s1 + $0x28] sm:$0xff]
    %v71 = vld [vmem:[%s1 + $0x30] sm:$0xff]
    %v72 = vld [vmem:[%s1 + $0x38] sm:$0xff]
    %v73 = vld [vmem:[%s2] sm:$0xf]
    %v75 = vperm.slane %v73, 0
    %v76 = vperm.slane %v73, 1
    %v77 = vperm.slane %v73, 2
    %v78 = vperm.slane %v73, 3
    %v91 = vunpack.c.l.b16 %v65
    %v92 = vunpack.c.h.b16 %v65
    %v93 = vunpack.c.l.b16 %v66
    %v94 = vunpack.c.h.b16 %v66
    %v95 = vunpack.c.l.b16 %v67
    %v96 = vunpack.c.h.b16 %v67
    %v97 = vunpack.c.l.b16 %v68
    %v98 = vunpack.c.h.b16 %v68
    %v99 = vunpack.c.l.b16 %v69
    %v100 = vunpack.c.h.b16 %v69
    %v101 = vunpack.c.l.b16 %v70
    %v102 = vunpack.c.h.b16 %v70
    %v103 = vunpack.c.l.b16 %v71
    %v104 = vunpack.c.h.b16 %v71
    %v105 = vunpack.c.l.b16 %v72
    %v106 = vunpack.c.h.b16 %v72
    %v107 = vpack.c.b16 %v95, %v91
    %v108 = vpack.c.b16 %v96, %v92
    %v109 = vpack.c.b16 %v97, %v93
    %v110 = vpack.c.b16 %v98, %v94
    %v111 = vpack.c.b16 %v103, %v99
    %v112 = vpack.c.b16 %v104, %v100
    %v113 = vpack.c.b16 %v105, %v101
    %v114 = vpack.c.b16 %v106, %v102
    %v124 = vsel %vm38, %v64, 0
    %126 = vmatpush.bf16.msra.mxu0 0
    %127 = vmatpush.bf16.msra.mxu0 0
    %128 = vmatpush.bf16.msra.mxu0 0
    %129 = vmatpush.bf16.msra.mxu0 0
    %130 = vmatpush.bf16.msra.mxu0 0
    %131 = vmatpush.bf16.msra.mxu0 0
    %132 = vmatpush.bf16.msra.mxu0 %v111
    %133 = vmatpush.bf16.msra.mxu0 %v107
    %134 = vmatmul.bf16.gmra.mxu0 %v124
    %v135 = vpop.f32.mrf.mxu0
    %v136 = vadd.f32 %v75, %v135
    %v137 = vpop.f32.mrf.mxu0
    %138 = vdwg.mxu0
    %139 = vmatpush.bf16.msra.mxu0 0
    %140 = vmatpush.bf16.msra.mxu0 0
    %141 = vmatpush.bf16.msra.mxu0 0
    %142 = vmatpush.bf16.msra.mxu0 0
    %143 = vmatpush.bf16.msra.mxu0 0
    %144 = vmatpush.bf16.msra.mxu0 0
    %145 = vmatpush.bf16.msra.mxu0 %v112
    %146 = vmatpush.bf16.msra.mxu0 %v108
    %147 = vmatmul.bf16.gmra.mxu0 %v124
    %v148 = vpop.f32.mrf.mxu0
    %v149 = vadd.f32 %v76, %v148
    %v150 = vpop.f32.mrf.mxu0
    %151 = vdwg.mxu0
    %152 = vmatpush.bf16.msra.mxu0 0
    %153 = vmatpush.bf16.msra.mxu0 0
    %154 = vmatpush.bf16.msra.mxu0 0
    %155 = vmatpush.bf16.msra.mxu0 0
    %156 = vmatpush.bf16.msra.mxu0 0
    %157 = vmatpush.bf16.msra.mxu0 0
    %158 = vmatpush.bf16.msra.mxu0 %v113
    %159 = vmatpush.bf16.msra.mxu0 %v109
    %160 = vmatmul.bf16.gmra.mxu0 %v124
    %v161 = vpop.f32.mrf.mxu0
    %v162 = vadd.f32 %v77, %v161
    %v163 = vpop.f32.mrf.mxu0
    %164 = vdwg.mxu0
    %165 = vmatpush.bf16.msra.mxu0 0
    %166 = vmatpush.bf16.msra.mxu0 0
    %167 = vmatpush.bf16.msra.mxu0 0
    %168 = vmatpush.bf16.msra.mxu0 0
    %169 = vmatpush.bf16.msra.mxu0 0
    %170 = vmatpush.bf16.msra.mxu0 0
    %171 = vmatpush.bf16.msra.mxu0 %v114
    %172 = vmatpush.bf16.msra.mxu0 %v110
    %173 = vmatmul.bf16.gmra.mxu0 %v124
    %v174 = vpop.f32.mrf.mxu0
    %v175 = vadd.f32 %v78, %v174
    %v176 = vpop.f32.mrf.mxu0
    %177 = vdwg.mxu0
    %v178 = vxor.u32 %v162, 2147483648
    %v179 = vxor.u32 %v175, 2147483648
    %v180 = vmul.f32 %v178, 1.442695
    %v181 = vpow.pop %v180
    %v182 = vmul.f32 %v179, 1.442695
    %v183 = vpow.pop %v182
    %v184 = vadd.f32 %v181, 1.0
    %v185 = vadd.f32 %v183, 1.0
    %v186 = vrcp.pop %v184
    %v187 = vmul.f32 %v184, %v186
    %v188 = vsub.f32 1.0, %v187
    %v189 = vmul.f32 %v186, %v188
    %v190 = vadd.f32 %v186, %v189
    %vm191 = vweird.f32 %v184
    %vm192 = vweird.f32 %v186
    %vm193 = vmor %vm191, %vm192
    %v194 = vsel %vm193, %v186, %v190
    %v195 = vand.u32 2147483647, %v184
    %vm196 = vcmp.eq.f32.partialorder %v195, 8.507059e+37
    %v197 = vand.u32 %v184, 2147483648
    %v198 = vor.u32 1.1754944e-38, %v197
    %v199 = vsel %vm196, %v198, %v194
    %v200 = vmul.f32 1.0, %v199
    %v201 = vrcp.pop %v185
    %v202 = vmul.f32 %v185, %v201
    %v203 = vsub.f32 1.0, %v202
    %v204 = vmul.f32 %v201, %v203
    %v205 = vadd.f32 %v201, %v204
    %vm206 = vweird.f32 %v185
    %vm207 = vweird.f32 %v201
    %vm208 = vmor %vm206, %vm207
    %v209 = vsel %vm208, %v201, %v205
    %v210 = vand.u32 2147483647, %v185
    %vm211 = vcmp.eq.f32.partialorder %v210, 8.507059e+37
    %v212 = vand.u32 %v185, 2147483648
    %v213 = vor.u32 1.1754944e-38, %v212
    %v214 = vsel %vm211, %v213, %v209
    %v215 = vmul.f32 1.0, %v214
    %v216 = vmul.f32 %v136, %v200
    %v217 = vmul.f32 %v149, %v215
    %v218 = vmax.f32 %v216, 0.0
    %v219 = vmax.f32 %v217, 0.0
    %v220 = vadd.f32 %v218, %v219
    %221 = vadd.xlane.f32.xlu0 %v220
    %v222 = vpop.xlane.xlu0 %221
    %v223 = vmul.f32 %v218, %v218
    %v224 = vmul.f32 %v219, %v219
    %v225 = vadd.f32 %v223, %v224
    %226 = vadd.xlane.f32.xlu0 %v225
    %v227 = vpop.xlane.xlu0 %226
    %v228 = vmul.f32 %v222, 0.00390625
    %v229 = vmul.f32 %v227, 0.00390625
    %v230 = vmul.f32 %v228, %v228
    %v231 = vsub.f32 %v229, %v230
    %v232 = vmax.f32 %v231, 0.0
    %v233 = vsub.f32 %v218, %v228
    %v234 = vsub.f32 %v219, %v228
    %v235 = vadd.f32 %v232, 1e-05
    %v236 = vrsqrt.pop %v235
    %v237 = vmul.f32 %v236, %v235
    %v238 = vmul.f32 %v237, %v236
    %v239 = vmul.f32 0.5, %v238
    %v240 = vsub.f32 1.5, %v239
    %v241 = vmul.f32 %v236, %v240
    %vm242 = vweird.f32 %v235
    %vm243 = vweird.f32 %v236
    %vm244 = vmor %vm242, %vm243
    %v245 = vsel %vm244, %v236, %v241
    %v246 = vmul.f32 %v233, %v245
    %v247 = vmul.f32 %v234, %v245
    %v248 = vpack.c.bf16 %v246, %v246
    %v249 = vpack.c.bf16 %v247, %v247
    %v250 = vld [vmem:[%s3] sm:$0xf]
    %v251 = vld [vmem:[%s3 + $0x4] sm:$0xf]
    %v252 = vld [vmem:[%s3 + $0x8] sm:$0xf]
    %v253 = vld [vmem:[%s3 + $0xc] sm:$0xf]
    %v254 = vld [vmem:[%s3 + $0x10] sm:$0xf]
    %v255 = vld [vmem:[%s3 + $0x14] sm:$0xf]
    %v256 = vld [vmem:[%s3 + $0x18] sm:$0xf]
    %v257 = vld [vmem:[%s3 + $0x1c] sm:$0xf]
    %v258 = vld [vmem:[%s3 + $0x20] sm:$0xf]
    %v259 = vld [vmem:[%s3 + $0x24] sm:$0xf]
    %v260 = vld [vmem:[%s3 + $0x28] sm:$0xf]
    %v261 = vld [vmem:[%s3 + $0x2c] sm:$0xf]
    %v262 = vld [vmem:[%s3 + $0x30] sm:$0xf]
    %v263 = vld [vmem:[%s3 + $0x34] sm:$0xf]
    %v264 = vld [vmem:[%s3 + $0x38] sm:$0xf]
    %v265 = vld [vmem:[%s3 + $0x3c] sm:$0xf]
    %v266 = vld [vmem:[%s3 + $0x40] sm:$0xf]
    %v267 = vld [vmem:[%s3 + $0x44] sm:$0xf]
    %v268 = vld [vmem:[%s3 + $0x48] sm:$0xf]
    %v269 = vld [vmem:[%s3 + $0x4c] sm:$0xf]
    %v270 = vld [vmem:[%s3 + $0x50] sm:$0xf]
    %v271 = vld [vmem:[%s3 + $0x54] sm:$0xf]
    %v272 = vld [vmem:[%s3 + $0x58] sm:$0xf]
    %v273 = vld [vmem:[%s3 + $0x5c] sm:$0xf]
    %v274 = vld [vmem:[%s3 + $0x60] sm:$0xf]
    %v275 = vld [vmem:[%s3 + $0x64] sm:$0xf]
    %v276 = vld [vmem:[%s3 + $0x68] sm:$0xf]
    %v277 = vld [vmem:[%s3 + $0x6c] sm:$0xf]
    %v278 = vld [vmem:[%s3 + $0x70] sm:$0xf]
    %v279 = vld [vmem:[%s3 + $0x74] sm:$0xf]
    %v280 = vld [vmem:[%s3 + $0x78] sm:$0xf]
    %v281 = vld [vmem:[%s3 + $0x7c] sm:$0xf]
    %v282 = vld [vmem:[%s4] sm:$0x1]
    %v284 = vperm.slane %v282, 0
    %v318 = vunpack.c.l.b16 %v250
    %v319 = vunpack.c.l.b16 %v251
    %v320 = vunpack.c.l.b16 %v252
    %v321 = vunpack.c.l.b16 %v253
    %v322 = vunpack.c.l.b16 %v254
    %v323 = vunpack.c.l.b16 %v255
    %v324 = vunpack.c.l.b16 %v256
    %v325 = vunpack.c.l.b16 %v257
    %v326 = vunpack.c.l.b16 %v258
    %v327 = vunpack.c.l.b16 %v259
    %v328 = vunpack.c.l.b16 %v260
    %v329 = vunpack.c.l.b16 %v261
    %v330 = vunpack.c.l.b16 %v262
    %v331 = vunpack.c.l.b16 %v263
    %v332 = vunpack.c.l.b16 %v264
    %v333 = vunpack.c.l.b16 %v265
    %v334 = vunpack.c.l.b16 %v266
    %v335 = vunpack.c.l.b16 %v267
    %v336 = vunpack.c.l.b16 %v268
    %v337 = vunpack.c.l.b16 %v269
    %v338 = vunpack.c.l.b16 %v270
    %v339 = vunpack.c.l.b16 %v271
    %v340 = vunpack.c.l.b16 %v272
    %v341 = vunpack.c.l.b16 %v273
    %v342 = vunpack.c.l.b16 %v274
    %v343 = vunpack.c.l.b16 %v275
    %v344 = vunpack.c.l.b16 %v276
    %v345 = vunpack.c.l.b16 %v277
    %v346 = vunpack.c.l.b16 %v278
    %v347 = vunpack.c.l.b16 %v279
    %v348 = vunpack.c.l.b16 %v280
    %v349 = vunpack.c.l.b16 %v281
    %v350 = vpack.c.b16 %v319, %v318
    %v351 = vpack.c.b16 %v321, %v320
    %v352 = vpack.c.b16 %v323, %v322
    %v353 = vpack.c.b16 %v325, %v324
    %v354 = vpack.c.b16 %v327, %v326
    %v355 = vpack.c.b16 %v329, %v328
    %v356 = vpack.c.b16 %v331, %v330
    %v357 = vpack.c.b16 %v333, %v332
    %v358 = vpack.c.b16 %v335, %v334
    %v359 = vpack.c.b16 %v337, %v336
    %v360 = vpack.c.b16 %v339, %v338
    %v361 = vpack.c.b16 %v341, %v340
    %v362 = vpack.c.b16 %v343, %v342
    %v363 = vpack.c.b16 %v345, %v344
    %v364 = vpack.c.b16 %v347, %v346
    %v365 = vpack.c.b16 %v349, %v348
    %382 = vmatpush.bf16.msra.mxu0 %v357
    %383 = vmatpush.bf16.msra.mxu0 %v356
    %384 = vmatpush.bf16.msra.mxu0 %v355
    %385 = vmatpush.bf16.msra.mxu0 %v354
    %386 = vmatpush.bf16.msra.mxu0 %v353
    %387 = vmatpush.bf16.msra.mxu0 %v352
    %388 = vmatpush.bf16.msra.mxu0 %v351
    %389 = vmatpush.bf16.msra.mxu0 %v350
    %390 = vmatmul.bf16.gmra.mxu0 %v248
    %v391 = vpop.f32.mrf.mxu0
    %v392 = vadd.f32 %v284, %v391
    %v393 = vpop.f32.mrf.mxu0
    %394 = vdwg.mxu0
    %395 = vmatpush.bf16.msra.mxu0 %v365
    %396 = vmatpush.bf16.msra.mxu0 %v364
    %397 = vmatpush.bf16.msra.mxu0 %v363
    %398 = vmatpush.bf16.msra.mxu0 %v362
    %399 = vmatpush.bf16.msra.mxu0 %v361
    %400 = vmatpush.bf16.msra.mxu0 %v360
    %401 = vmatpush.bf16.msra.mxu0 %v359
    %402 = vmatpush.bf16.msra.mxu0 %v358
    %403 = vmatmul.bf16.gmra.mxu0 %v249
    %v404 = vpop.f32.mrf.mxu0
    %v405 = vadd.f32 %v392, %v404
    %v406 = vpop.f32.mrf.mxu0
    %407 = vdwg.mxu0
    %vm408 = vcmask 31744
    %v409 = vsel %vm408, %v405, -inf
    %v410 = vrot.slane %v409, 4
    %v411 = vmax.f32 %v409, %v410
    %v412 = vrot.slane %v411, 2
    %v413 = vmax.f32 %v411, %v412
    %v414 = vrot.slane %v413, 1
    %v415 = vmax.f32 %v413, %v414
    %v416 = vsub.f32 %v405, %v415
    %v417 = vmul.f32 %v416, 1.442695
    %v418 = vpow.pop %v417
    %v419 = vsel %vm408, %v418, 0.0
    %v420 = vrot.slane %v419, 4
    %v421 = vadd.f32 %v419, %v420
    %v422 = vrot.slane %v421, 2
    %v423 = vadd.f32 %v421, %v422
    %v424 = vrot.slane %v423, 1
    %v425 = vadd.f32 %v423, %v424
    %v426 = vrcp.pop %v425
    %v427 = vmul.f32 %v425, %v426
    %v428 = vsub.f32 1.0, %v427
    %v429 = vmul.f32 %v426, %v428
    %v430 = vadd.f32 %v426, %v429
    %vm431 = vweird.f32 %v425
    %vm432 = vweird.f32 %v426
    %vm433 = vmor %vm431, %vm432
    %v434 = vsel %vm433, %v426, %v430
    %v435 = vand.u32 2147483647, %v425
    %vm436 = vcmp.eq.f32.partialorder %v435, 8.507059e+37
    %v437 = vand.u32 %v425, 2147483648
    %v438 = vor.u32 1.1754944e-38, %v437
    %v439 = vsel %vm436, %v438, %v434
    %v440 = vmul.f32 %v418, %v439
    %v441 = vlaneseq
    %v442 = vshrl.u32 %v441, 7
    %v443 = vperm.slane %v440, 0
    %vm444 = vcmp.gt.f32.partialorder %v443, %v440
    %vm445 = vcmp.eq.f32.partialorder %v443, %v440
    %vm446 = vcmp.gt.s32.totalorder %v442, 0
    %vm447 = vmand %vm445, %vm446
    %vm448 = vmor %vm444, %vm447
    %v449 = vsel %vm448, 1, 0
    %v450 = vcvt.s32.f32 %v449
    %v451 = vadd.f32 %v450, 0.0
    %v452 = vperm.slane %v440, 1
    %vm453 = vcmp.gt.f32.partialorder %v452, %v440
    %vm454 = vcmp.eq.f32.partialorder %v452, %v440
    %vm455 = vcmp.gt.s32.totalorder %v442, 1
    %vm456 = vmand %vm454, %vm455
    %vm457 = vmor %vm453, %vm456
    %v458 = vsel %vm457, 1, 0
    %v459 = vcvt.s32.f32 %v458
    %v460 = vadd.f32 %v451, %v459
    %v461 = vperm.slane %v440, 2
    %vm462 = vcmp.gt.f32.partialorder %v461, %v440
    %vm463 = vcmp.eq.f32.partialorder %v461, %v440
    %vm464 = vcmp.gt.s32.totalorder %v442, 2
    %vm465 = vmand %vm463, %vm464
    %vm466 = vmor %vm462, %vm465
    %v467 = vsel %vm466, 1, 0
    %v468 = vcvt.s32.f32 %v467
    %v469 = vadd.f32 %v460, %v468
    %v470 = vperm.slane %v440, 3
    %vm471 = vcmp.gt.f32.partialorder %v470, %v440
    %vm472 = vcmp.eq.f32.partialorder %v470, %v440
    %vm473 = vcmp.gt.s32.totalorder %v442, 3
    %vm474 = vmand %vm472, %vm473
    %vm475 = vmor %vm471, %vm474
    %v476 = vsel %vm475, 1, 0
    %v477 = vcvt.s32.f32 %v476
    %v478 = vadd.f32 %v469, %v477
    %v479 = vperm.slane %v440, 4
    %vm480 = vcmp.gt.f32.partialorder %v479, %v440
    %vm481 = vcmp.eq.f32.partialorder %v479, %v440
    %vm482 = vcmp.gt.s32.totalorder %v442, 4
    %vm483 = vmand %vm481, %vm482
    %vm484 = vmor %vm480, %vm483
    %v485 = vsel %vm484, 1, 0
    %v486 = vcvt.s32.f32 %v485
    %v487 = vadd.f32 %v478, %v486
    %v488 = vperm.slane %v440, 5
    %vm489 = vcmp.gt.f32.partialorder %v488, %v440
    %vm490 = vcmp.eq.f32.partialorder %v488, %v440
    %vm491 = vcmp.gt.s32.totalorder %v442, 5
    %vm492 = vmand %vm490, %vm491
    %vm493 = vmor %vm489, %vm492
    %v494 = vsel %vm493, 1, 0
    %v495 = vcvt.s32.f32 %v494
    %v496 = vadd.f32 %v487, %v495
    %v497 = vperm.slane %v440, 6
    %vm498 = vcmp.gt.f32.partialorder %v497, %v440
    %vm499 = vcmp.eq.f32.partialorder %v497, %v440
    %vm500 = vcmp.gt.s32.totalorder %v442, 6
    %vm501 = vmand %vm499, %vm500
    %vm502 = vmor %vm498, %vm501
    %v503 = vsel %vm502, 1, 0
    %v504 = vcvt.s32.f32 %v503
    %v505 = vadd.f32 %v496, %v504
    %v506 = vperm.slane %v440, 7
    %vm507 = vcmp.gt.f32.partialorder %v506, %v440
    %vm508 = vcmp.eq.f32.partialorder %v506, %v440
    %vm509 = vcmp.gt.s32.totalorder %v442, 7
    %vm510 = vmand %vm508, %vm509
    %vm511 = vmor %vm507, %vm510
    %v512 = vsel %vm511, 1, 0
    %v513 = vcvt.s32.f32 %v512
    %v514 = vadd.f32 %v505, %v513
    %vm515 = vcmp.lt.f32.partialorder %v514, 4.0
    %v516 = vsel %vm515, 1, 0
    %v517 = vcvt.s32.f32 %v516
    %v518 = vmul.f32 %v440, 1.442695
    %v519 = vpow.pop %v518
    %v520 = vmul.f32 %v517, %v519
    %v521 = vsel %vm408, %v520, 0.0
    %v522 = vrot.slane %v521, 4
    %v523 = vadd.f32 %v521, %v522
    %v524 = vrot.slane %v523, 2
    %v525 = vadd.f32 %v523, %v524
    %v526 = vrot.slane %v525, 1
    %v527 = vadd.f32 %v525, %v526
    %v528 = vrcp.pop %v527
    %v529 = vmul.f32 %v527, %v528
    %v530 = vsub.f32 1.0, %v529
    %v531 = vmul.f32 %v528, %v530
    %v532 = vadd.f32 %v528, %v531
    %vm533 = vweird.f32 %v527
    %vm534 = vweird.f32 %v528
    %vm535 = vmor %vm533, %vm534
    %v536 = vsel %vm535, %v528, %v532
    %v537 = vand.u32 2147483647, %v527
    %vm538 = vcmp.eq.f32.partialorder %v537, 8.507059e+37
    %v539 = vand.u32 %v527, 2147483648
    %v540 = vor.u32 1.1754944e-38, %v539
    %v541 = vsel %vm538, %v540, %v536
    %v542 = vmul.f32 %v520, %v541
    %v543 = vld [vmem:[%s5] sm:$0xf]
    %v544 = vld [vmem:[%s5 + $0x4] sm:$0xf]
    %v545 = vld [vmem:[%s5 + $0x8] sm:$0xf]
    %v546 = vld [vmem:[%s5 + $0xc] sm:$0xf]
    %v547 = vld [vmem:[%s6] sm:$0x1]
    %v549 = vperm.slane %v547, 0
    %v555 = vunpack.c.l.b16 %v543
    %v556 = vunpack.c.l.b16 %v544
    %v557 = vunpack.c.l.b16 %v545
    %v558 = vunpack.c.l.b16 %v546
    %v559 = vpack.c.b16 %v556, %v555
    %v560 = vpack.c.b16 %v558, %v557
    %563 = vmatpush.bf16.msra.mxu0 0
    %564 = vmatpush.bf16.msra.mxu0 0
    %565 = vmatpush.bf16.msra.mxu0 0
    %566 = vmatpush.bf16.msra.mxu0 0
    %567 = vmatpush.bf16.msra.mxu0 0
    %568 = vmatpush.bf16.msra.mxu0 0
    %569 = vmatpush.bf16.msra.mxu0 %v560
    %570 = vmatpush.bf16.msra.mxu0 %v559
    %571 = vmatmul.bf16.gmra.mxu0 %v124
    %v572 = vpop.f32.mrf.mxu0
    %v573 = vadd.f32 %v549, %v572
    %v574 = vpop.f32.mrf.mxu0
    %575 = vdwg.mxu0
    %v576 = vld [vmem:[%s7] sm:$0xf]
    %v578 = vsel %vm408, %v542, 0
    %vm580 = vcmask 1043456
    %v582 = vsel %vm580, %v576, 0
    %584 = vmatpush.msra.mxu0 0.0
    %585 = vmatpush.msra.mxu0 0.0
    %586 = vmatpush.msra.mxu0 0.0
    %587 = vmatpush.msra.mxu0 0.0
    %588 = vmatpush.msra.mxu0 0.0
    %589 = vmatpush.msra.mxu0 0.0
    %590 = vmatpush.msra.mxu0 0.0
    %591 = vmatpush.msra.mxu0 0.0
    %592 = vmatpush.msra.mxu0 0.0
    %593 = vmatpush.msra.mxu0 0.0
    %594 = vmatpush.msra.mxu0 0.0
    %595 = vmatpush.msra.mxu0 0.0
    %596 = vmatpush.msra.mxu0 0.0
    %597 = vmatpush.msra.mxu0 0.0
    %598 = vmatpush.msra.mxu0 0.0
    %599 = vmatpush.msra.mxu0 %v582
    %600 = vmatmul.f32.gmra.mxu0 %v578
    %v601 = vpop.f32.mrf.mxu0
    %v602 = vadd.f32 0.0, %v601
    %603 = vdwg.mxu0
    %v604 = vmul.f32 %v573, %v602
    %v605 = vld [vmem:[%s8] sm:$0xff]
    %v606 = vld [vmem:[%s8 + $0x8] sm:$0xff]
    %v607 = vld [vmem:[%s8 + $0x10] sm:$0xff]
    %v608 = vld [vmem:[%s8 + $0x18] sm:$0xff]
    %v609 = vld [vmem:[%s8 + $0x20] sm:$0xff]
    %v610 = vld [vmem:[%s8 + $0x28] sm:$0xff]
    %v611 = vld [vmem:[%s8 + $0x30] sm:$0xff]
    %v612 = vld [vmem:[%s8 + $0x38] sm:$0xff]
    %vm613 = vcmask 523264
    %v615 = vsel %vm613, %v604, 0
    %617 = vmatpush.msra.mxu0 0.0
    %618 = vmatpush.msra.mxu0 0.0
    %619 = vmatpush.msra.mxu0 0.0
    %620 = vmatpush.msra.mxu0 0.0
    %621 = vmatpush.msra.mxu0 0.0
    %622 = vmatpush.msra.mxu0 0.0
    %623 = vmatpush.msra.mxu0 0.0
    %624 = vmatpush.msra.mxu0 0.0
    %625 = vmatpush.msra.mxu0 %v612
    %626 = vmatpush.msra.mxu0 %v611
    %627 = vmatpush.msra.mxu0 %v610
    %628 = vmatpush.msra.mxu0 %v609
    %629 = vmatpush.msra.mxu0 %v608
    %630 = vmatpush.msra.mxu0 %v607
    %631 = vmatpush.msra.mxu0 %v606
    %632 = vmatpush.msra.mxu0 %v605
    %633 = vmatmul.f32.gmra.mxu0 %v615
    %v634 = vpop.f32.mrf.mxu0
    %v635 = vadd.f32 0.0, %v634
    %636 = vdwg.mxu0
    %vm637 = vcmask 130048
    %v638 = vsel %vm637, %v635, 0.0
    %639 = vadd.xlane.f32.xlu0 %v638
    %v640 = vpop.xlane.xlu0 %639
    %v641 = vmul.f32 %v635, %v635
    %v642 = vsel %vm637, %v641, 0.0
    %643 = vadd.xlane.f32.xlu0 %v642
    %v644 = vpop.xlane.xlu0 %643
    %v645 = vmul.f32 %v640, 0.0625
    %v646 = vmul.f32 %v644, 0.0625
    %v647 = vmul.f32 %v645, %v645
    %v648 = vsub.f32 %v646, %v647
    %v649 = vmax.f32 %v648, 0.0
    %v650 = vsub.f32 %v635, %v645
    %v651 = vadd.f32 %v649, 1e-05
    %v652 = vrsqrt.pop %v651
    %v653 = vmul.f32 %v652, %v651
    %v654 = vmul.f32 %v653, %v652
    %v655 = vmul.f32 0.5, %v654
    %v656 = vsub.f32 1.5, %v655
    %v657 = vmul.f32 %v652, %v656
    %vm658 = vweird.f32 %v651
    %vm659 = vweird.f32 %v652
    %vm660 = vmor %vm658, %vm659
    %v661 = vsel %vm660, %v652, %v657
    %v662 = vmul.f32 %v650, %v661
    %v663 = vld [vmem:[%s9] sm:$0xff]
    %v664 = vld [vmem:[%s9 + $0x8] sm:$0xff]
    %v666 = vsel %vm637, %v662, 0
    %668 = vmatpush.msra.mxu0 0.0
    %669 = vmatpush.msra.mxu0 0.0
    %670 = vmatpush.msra.mxu0 0.0
    %671 = vmatpush.msra.mxu0 0.0
    %672 = vmatpush.msra.mxu0 0.0
    %673 = vmatpush.msra.mxu0 0.0
    %674 = vmatpush.msra.mxu0 0.0
    %675 = vmatpush.msra.mxu0 0.0
    %676 = vmatpush.msra.mxu0 0.0
    %677 = vmatpush.msra.mxu0 0.0
    %678 = vmatpush.msra.mxu0 0.0
    %679 = vmatpush.msra.mxu0 0.0
    %680 = vmatpush.msra.mxu0 0.0
    %681 = vmatpush.msra.mxu0 0.0
    %682 = vmatpush.msra.mxu0 %v664
    %683 = vmatpush.msra.mxu0 %v663
    %684 = vmatmul.f32.gmra.mxu0 %v666
    %v685 = vpop.f32.mrf.mxu0
    %v686 = vadd.f32 0.0, %v685
    %687 = vdwg.mxu0
    %v688 = vadd.f32 %v604, %v686
    %v689 = vsel %vm613, %v688, 0.0
    %690 = vadd.xlane.f32.xlu0 %v689
    %v691 = vpop.xlane.xlu0 %690
    %v692 = vmul.f32 %v688, %v688
    %v693 = vsel %vm613, %v692, 0.0
    %694 = vadd.xlane.f32.xlu0 %v693
    %v695 = vpop.xlane.xlu0 %694
    %v696 = vmul.f32 %v691, 0.015625
    %v697 = vmul.f32 %v695, 0.015625
    %v698 = vmul.f32 %v696, %v696
    %v699 = vsub.f32 %v697, %v698
    %v700 = vmax.f32 %v699, 0.0
    %v701 = vsub.f32 %v688, %v696
    %v702 = vadd.f32 %v700, 1e-05
    %v703 = vrsqrt.pop %v702
    %v704 = vmul.f32 %v703, %v702
    %v705 = vmul.f32 %v704, %v703
    %v706 = vmul.f32 0.5, %v705
    %v707 = vsub.f32 1.5, %v706
    %v708 = vmul.f32 %v703, %v707
    %vm709 = vweird.f32 %v702
    %vm710 = vweird.f32 %v703
    %vm711 = vmor %vm709, %vm710
    %v712 = vsel %vm711, %v703, %v708
    %v713 = vmul.f32 %v701, %v712
    %714 = vst.msk [vmem:[#allocation2] sm:$0xff] %vm613, %v713
    // Predicated region
    $region42: #{moe_forward.1} parent=1 // pred_check
      _
    $region43: #{moe_forward.1} parent=1 // pred_check_branch
      %716 = sbr.rel (0) target = $region45
    $region44: #{moe_forward.1} parent=1 // pred_region
      %718 = vsyncadd [#allocation3], 0
      %s720 = sshll.u32 [#allocation2], 4
      %s721 = int_to_ptr.vmem [resolvable:$true] %s720
      %s722 = sshll.u32 %s10, 4
      %s723 = int_to_ptr.hbm [resolvable:$true] %s722
      %725 = dma.vmem_to_hbm [thread:$0]  %s721, 128, %s723, [#allocation3]
    $region45: #{moe_forward.1} parent=1 // pred_fallthru
      _
    // Predicated region
    $region46: #{moe_forward.1} parent=1 // pred_check
      _
    $region47: #{moe_forward.1} parent=1 // pred_check_branch
      %727 = sbr.rel (0) target = $region49
    $region48: #{moe_forward.1} parent=1 // pred_region
      %729 = dma.done [#allocation3], 128
    $region49: #{moe_forward.1} parent=1 // pred_fallthru
      _
    %730 = vsyncpa [#allocation3], 1

</llo_original>
